<compile_context>
chip_gen: v7x
topology: tpu7x:2x2x1
jax: 0.10.0
libtpu: 0.0.40
codegen_flags: <defaults>
</compile_context>

<pallas_src>
import jax
import jax.numpy as jnp
import numpy as np
from jax.experimental import pallas as pl
from jax.experimental.pallas import tpu as pltpu


def critic_kernel(x_ref, w1_ref, b1_ref, w2_ref, b2_ref, w3_ref, b3_ref, o_ref):
    x = x_ref[...]                                                        # (TB, D)
    # Layer 1: MXU matmul + bias + ReLU (VPU).
    h1 = jnp.dot(x, w1_ref[...], preferred_element_type=jnp.float32) + b1_ref[...]
    h1 = jnp.maximum(h1, 0.0)                                             # (TB, H1)
    # Layer 2: MXU matmul + bias + ReLU (VPU).
    h2 = jnp.dot(h1, w2_ref[...], preferred_element_type=jnp.float32) + b2_ref[...]
    h2 = jnp.maximum(h2, 0.0)                                             # (TB, H2)
    # Layer 3 (H2 -> 1): VPU multiply + XLU cross-lane reduction instead of an
    # N=1 MXU matmul; bias is a scalar read from SMEM.
    v = jnp.sum(h2 * w3_ref[...], axis=-1) + b3_ref[0, 0]                 # (TB,)
    # Lane-dense store: output block is (1, 1, TB) so the last dim maps to lanes.
    o_ref[...] = v[None, None, :].astype(o_ref.dtype)


def _round_up(x, m):
    return ((x + m - 1) // m) * m


def critic_forward(state, params, *, block_rows=512):
    """state: (B, input_dim) f32 -> value: (B, 1) f32 (same semantics as torch)."""
    w1, b1, w2, b2, w3, b3 = params
    B, D = state.shape
    H1 = w1.shape[1]
    H2 = w2.shape[1]

    # Tile size: multiple of 128 (lane-dense output store, full MXU rows),
    # no larger than needed for small batches, capped at `block_rows`.
    TB = max(128, min(_round_up(block_rows, 128), _round_up(B, 128)))
    num_tiles = pl.cdiv(B, TB)
    B_pad = num_tiles * TB
    if B_pad != B:
        # Zero-pad the batch so every tile is full; padded rows are sliced off below.
        state = jnp.pad(state, ((0, B_pad - B), (0, 0)))

    out = pl.pallas_call(
        critic_kernel,
        out_shape=jax.ShapeDtypeStruct((num_tiles, 1, TB), jnp.float32),
        grid=(num_tiles,),
        in_specs=[
            pl.BlockSpec((TB, D), lambda i: (i, 0)),            # x tile: streamed / double-buffered
            pl.BlockSpec((D, H1), lambda i: (0, 0)),            # weights/biases: constant block
            pl.BlockSpec((1, H1), lambda i: (0, 0)),            #   index -> VMEM-resident,
            pl.BlockSpec((H1, H2), lambda i: (0, 0)),           #   DMA'd once for all tiles
            pl.BlockSpec((1, H2), lambda i: (0, 0)),
            pl.BlockSpec((1, H2), lambda i: (0, 0)),            # w3 stored as (1, H2)
            pl.BlockSpec(memory_space=pltpu.MemorySpace.SMEM),  # b3 scalar lives in SMEM
        ],
        out_specs=pl.BlockSpec((1, 1, TB), lambda i: (i, 0, 0)),
        compiler_params=pltpu.CompilerParams(
            dimension_semantics=("parallel",),
        ),
    )(state, w1, b1, w2, b2, w3, b3)

    # (num_tiles, 1, TB) row-major -> (B_pad, 1); drop padding rows.
    return out.reshape(B_pad, 1)[:B]


def init_params(key, input_dim, hidden1=256, hidden2=256):
    """Deterministic init mimicking PyTorch nn.Linear default (uniform +/- 1/sqrt(fan_in))."""
    ks = jax.random.split(key, 6)

    def lin(kw, kb, fan_in, fan_out):
        bound = 1.0 / np.sqrt(fan_in)
        w = jax.random.uniform(kw, (fan_in, fan_out), jnp.float32, -bound, bound)
        b = jax.random.uniform(kb, (1, fan_out), jnp.float32, -bound, bound)
        return w, b

    w1, b1 = lin(ks[0], ks[1], input_dim, hidden1)
    w2, b2 = lin(ks[2], ks[3], hidden1, hidden2)
    # Final layer weight stored as (1, hidden2) — this IS torch's layout for
    # Linear(hidden2, 1).weight — so the kernel can do a lane reduction.
    bound3 = 1.0 / np.sqrt(hidden2)
    w3 = jax.random.uniform(ks[4], (1, hidden2), jnp.float32, -bound3, bound3)
    b3 = jax.random.uniform(ks[5], (1, 1), jnp.float32, -bound3, bound3)
    return (w1, b1, w2, b2, w3, b3)


def critic_reference(state, params):
    w1, b1, w2, b2, w3, b3 = params
    h1 = jnp.maximum(state @ w1 + b1, 0.0)
    h2 = jnp.maximum(h1 @ w2 + b2, 0.0)
    return h2 @ w3.T + b3


if __name__ == "__main__":
    key = jax.random.PRNGKey(0)
    k_param, k_state = jax.random.split(key)

    batch = 8
    input_dim = 8          # input_units = (8,)
    hidden1 = hidden2 = 256

    params = init_params(k_param, input_dim, hidden1, hidden2)
    state = jax.random.normal(k_state, (batch, input_dim), dtype=jnp.float32)

    # Small-batch path (single 128-row tile after padding).
    value = jax.block_until_ready(critic_forward(state, params))
    ref = critic_reference(state, params)
    np.testing.assert_allclose(np.asarray(value), np.asarray(ref), rtol=1e-5, atol=1e-4)
    assert value.shape == (batch, 1)

    # Multi-tile path (batch not a multiple of the tile size) to exercise the
    # grid + padding logic a real PPO rollout batch would use.
    big_state = jax.random.normal(jax.random.PRNGKey(1), (1000, input_dim), dtype=jnp.float32)
    big_value = jax.block_until_ready(critic_forward(big_state, params, block_rows=256))
    big_ref = critic_reference(big_state, params)
    np.testing.assert_allclose(np.asarray(big_value), np.asarray(big_ref), rtol=1e-5, atol=1e-4)
    assert big_value.shape == (1000, 1)

    # TODO(synk): checkpoint save/load and the Adam optimizer from the torch
    # module are training-side utilities, not part of the forward pass.
    print("KERNEL_OK")
</pallas_src>

<mosaic_0001>
module attributes {stable_mosaic.version = 11 : i64} {
  func.func @critic_kernel(%arg0: i32, %arg1: memref<128x8xf32, #tpu.memory_space<vmem>>, %arg2: memref<8x256xf32, #tpu.memory_space<vmem>>, %arg3: memref<1x256xf32, #tpu.memory_space<vmem>>, %arg4: memref<256x256xf32, #tpu.memory_space<vmem>>, %arg5: memref<1x256xf32, #tpu.memory_space<vmem>>, %arg6: memref<1x256xf32, #tpu.memory_space<vmem>>, %arg7: memref<1x1xf32, #tpu.memory_space<smem>>, %arg8: memref<1x1x128xf32, #tpu.memory_space<vmem>>) attributes {dimension_semantics = [#tpu.dimension_semantics<parallel>], iteration_bounds = array<i64: 1>, scalar_prefetch = 0 : i64, scratch_operands = 0 : i64, tpu.core_type = #tpu.core_type<tc>, window_params = [{transform_indices = @transform_0, window_bounds = array<i64: 128, 8>}, {pipeline_mode = #tpu.pipeline_mode<synchronous>, transform_indices = @transform_1, window_bounds = array<i64: 8, 256>}, {pipeline_mode = #tpu.pipeline_mode<synchronous>, transform_indices = @transform_2, window_bounds = array<i64: 1, 256>}, {pipeline_mode = #tpu.pipeline_mode<synchronous>, transform_indices = @transform_3, window_bounds = array<i64: 256, 256>}, {pipeline_mode = #tpu.pipeline_mode<synchronous>, transform_indices = @transform_4, window_bounds = array<i64: 1, 256>}, {pipeline_mode = #tpu.pipeline_mode<synchronous>, transform_indices = @transform_5, window_bounds = array<i64: 1, 256>}, {transform_indices = @transform_6, window_bounds = array<i64: 1, 1>}, {transform_indices = @transform_7, window_bounds = array<i64: 1, 1, 128>}]} {
    %c0 = arith.constant 0 : index
    %c0_0 = arith.constant 0 : index
    %0 = vector.load %arg1[%c0, %c0_0] : memref<128x8xf32, #tpu.memory_space<vmem>>, vector<128x8xf32>
    %c0_1 = arith.constant 0 : index
    %c0_2 = arith.constant 0 : index
    %1 = vector.load %arg2[%c0_1, %c0_2] : memref<8x256xf32, #tpu.memory_space<vmem>>, vector<8x256xf32>
    %cst = arith.constant dense<0.000000e+00> : vector<128x256xf32>
    %2 = tpu.matmul %0, %1, %cst {dimension_numbers = #tpu.dot_dimension_numbers<[1], [0], [0], [1], [0, 0, 1, 1], [], []>} : vector<128x8xf32>, vector<8x256xf32>, vector<128x256xf32> -> vector<128x256xf32>
    %c0_3 = arith.constant 0 : index
    %c0_4 = arith.constant 0 : index
    %3 = vector.load %arg3[%c0_3, %c0_4] : memref<1x256xf32, #tpu.memory_space<vmem>>, vector<1x256xf32>
    %4 = vector.broadcast %3 : vector<1x256xf32> to vector<128x256xf32>
    %5 = arith.addf %2, %4 : vector<128x256xf32>
    %cst_5 = arith.constant 0.000000e+00 : f32
    %6 = vector.broadcast %cst_5 : f32 to vector<128x256xf32>
    %7 = arith.maximumf %5, %6 : vector<128x256xf32>
    %c0_6 = arith.constant 0 : index
    %c0_7 = arith.constant 0 : index
    %8 = vector.load %arg4[%c0_6, %c0_7] : memref<256x256xf32, #tpu.memory_space<vmem>>, vector<256x256xf32>
    %cst_8 = arith.constant dense<0.000000e+00> : vector<128x256xf32>
    %9 = tpu.matmul %7, %8, %cst_8 {dimension_numbers = #tpu.dot_dimension_numbers<[1], [0], [0], [1], [0, 0, 1, 1], [], []>} : vector<128x256xf32>, vector<256x256xf32>, vector<128x256xf32> -> vector<128x256xf32>
    %c0_9 = arith.constant 0 : index
    %c0_10 = arith.constant 0 : index
    %10 = vector.load %arg5[%c0_9, %c0_10] : memref<1x256xf32, #tpu.memory_space<vmem>>, vector<1x256xf32>
    %11 = vector.broadcast %10 : vector<1x256xf32> to vector<128x256xf32>
    %12 = arith.addf %9, %11 : vector<128x256xf32>
    %cst_11 = arith.constant 0.000000e+00 : f32
    %13 = vector.broadcast %cst_11 : f32 to vector<128x256xf32>
    %14 = arith.maximumf %12, %13 : vector<128x256xf32>
    %c0_12 = arith.constant 0 : index
    %c0_13 = arith.constant 0 : index
    %15 = vector.load %arg6[%c0_12, %c0_13] : memref<1x256xf32, #tpu.memory_space<vmem>>, vector<1x256xf32>
    %16 = vector.broadcast %15 : vector<1x256xf32> to vector<128x256xf32>
    %17 = arith.mulf %14, %16 : vector<128x256xf32>
    %cst_14 = arith.constant dense<0.000000e+00> : vector<128xf32>
    %18 = vector.multi_reduction <add>, %17, %cst_14 [1] : vector<128x256xf32> to vector<128xf32>
    %c0_15 = arith.constant 0 : index
    %c0_16 = arith.constant 0 : index
    %19 = memref.load %arg7[%c0_15, %c0_16] : memref<1x1xf32, #tpu.memory_space<smem>>
    %20 = vector.broadcast %19 : f32 to vector<128xf32>
    %21 = arith.addf %18, %20 : vector<128xf32>
    %22 = vector.shape_cast %21 : vector<128xf32> to vector<1x1x128xf32>
    %c0_17 = arith.constant 0 : index
    %c0_18 = arith.constant 0 : index
    %c0_19 = arith.constant 0 : index
    %23 = vector.load %arg8[%c0_17, %c0_18, %c0_19] : memref<1x1x128xf32, #tpu.memory_space<vmem>>, vector<1x1x128xf32>
    tpu.vector_store %arg8[%c0_17, %c0_18, %c0_19], %22 {strides = array<i32>} : memref<1x1x128xf32, #tpu.memory_space<vmem>>, vector<1x1x128xf32>,
    return
  }
  func.func @transform_0(%arg0: i32) -> (i32, i32) {
    %c0_i32 = arith.constant 0 : i32
    %c0_i32_0 = arith.constant 0 : i32
    return %arg0, %c0_i32 : i32, i32
  }
  func.func @transform_1(%arg0: i32) -> (i32, i32) {
    %c0_i32 = arith.constant 0 : i32
    %c0_i32_0 = arith.constant 0 : i32
    %c0_i32_1 = arith.constant 0 : i32
    return %c0_i32, %c0_i32_0 : i32, i32
  }
  func.func @transform_2(%arg0: i32) -> (i32, i32) {
    %c0_i32 = arith.constant 0 : i32
    %c0_i32_0 = arith.constant 0 : i32
    %c0_i32_1 = arith.constant 0 : i32
    return %c0_i32, %c0_i32_0 : i32, i32
  }
  func.func @transform_3(%arg0: i32) -> (i32, i32) {
    %c0_i32 = arith.constant 0 : i32
    %c0_i32_0 = arith.constant 0 : i32
    %c0_i32_1 = arith.constant 0 : i32
    return %c0_i32, %c0_i32_0 : i32, i32
  }
  func.func @transform_4(%arg0: i32) -> (i32, i32) {
    %c0_i32 = arith.constant 0 : i32
    %c0_i32_0 = arith.constant 0 : i32
    %c0_i32_1 = arith.constant 0 : i32
    return %c0_i32, %c0_i32_0 : i32, i32
  }
  func.func @transform_5(%arg0: i32) -> (i32, i32) {
    %c0_i32 = arith.constant 0 : i32
    %c0_i32_0 = arith.constant 0 : i32
    %c0_i32_1 = arith.constant 0 : i32
    return %c0_i32, %c0_i32_0 : i32, i32
  }
  func.func @transform_6(%arg0: i32) -> (i32, i32) {
    %c0_i32 = arith.constant 0 : i32
    %c0_i32_0 = arith.constant 0 : i32
    %c0_i32_1 = arith.constant 0 : i32
    return %c0_i32, %c0_i32_0 : i32, i32
  }
  func.func @transform_7(%arg0: i32) -> (i32, i32, i32) {
    %c0_i32 = arith.constant 0 : i32
    %c0_i32_0 = arith.constant 0 : i32
    %c0_i32_1 = arith.constant 0 : i32
    return %arg0, %c0_i32, %c0_i32_0 : i32, i32, i32
  }
}

</mosaic_0001>

<llo_original>
// kernel: tpu_custom_call.1
$region0: #{tpu_custom_call.1}
  #allocation0 [shape = 'u32[]', space=smem, size = 0x4, offset = 0x4, fixed_abs, tag = 'smem constant byte address 0x4 - core index']
  #allocation1 [shape = 'u32[144,128]{1,0:T(1,128)}', space=vmem, size = 0x12000, scoped, tag = 'internal scratch']
  #allocation2 [shape = 'f32[1,1]{1,0:T(1,128)S(6)}', space=smem, size = 0x200, scoped, tag = 'scoped memory for tpu_custom_call.1']
  %s0 = inlined_call_operand.vmem [shape: f32[128,8], index: 0, kind: input, shape index: {}]
  %s1 = inlined_call_operand.vmem [shape: f32[8,256], index: 1, kind: input, shape index: {}]
  %s2 = inlined_call_operand.vmem [shape: f32[1,256], index: 2, kind: input, shape index: {}]
  %s3 = inlined_call_operand.hbm [shape: f32[256,256], index: 3, kind: input, shape index: {}]
  %s4 = inlined_call_operand.vmem [shape: f32[1,256], index: 4, kind: input, shape index: {}]
  %s5 = inlined_call_operand.vmem [shape: f32[1,256], index: 5, kind: input, shape index: {}]
  %s6 = inlined_call_operand.<no memory space> [shape: f32[1,1], index: 6, kind: input, shape index: {}]
  %s7 = inlined_call_operand.hbm [shape: f32[1,1,128], index: 7, kind: output, shape index: {}]
  %s8 = sld [smem:[#allocation0]]
  $region42: #{tpu_custom_call.1} parent=0
    _
  %s10 = ssub.s32 1, %s8
  %s11 = scalar_select 0, %s10, %s8
  %12 = sst [smem:[#allocation2]] %s6
  $region1: #{tpu_custom_call.1} parent=0
    #allocation3 [shape = 'u8[262144]{0}', space=vmem, size = 0x40000, scoped, tag = 'input window, operand 3, single buffered']
    #allocation4 [shape = 's32[1]{0}', space=sflag, size = 0x4, scoped, tag = 'scoped memory for tpu_custom_call.1']
    #allocation5 [shape = 's32[1]{0}', space=sflag, size = 0x4, scoped, tag = 'scoped memory for tpu_custom_call.1']
    #allocation6 [shape = 'u8[512]{0}', space=vmem, size = 0x400, scoped, tag = 'output window, operand 0, single buffered']
    %13 = vsyncpa [#allocation4], 0
    %14 = vsyncpa [#allocation5], 0
    // Predicated region
    $region2: #{tpu_custom_call.1} parent=1 // pred_check
      _
    $region3: #{tpu_custom_call.1} parent=1 // pred_check_branch
      %16 = sbr.rel (0) target = $region5
    $region4: #{tpu_custom_call.1} parent=1 // pred_region
      _
    $region5: #{tpu_custom_call.1} parent=1 // pred_fallthru
      _
    // Predicated region
    $region6: #{tpu_custom_call.1} parent=1 // pred_check
      _
    $region7: #{tpu_custom_call.1} parent=1 // pred_check_branch
      %18 = sbr.rel (0) target = $region9
    $region8: #{tpu_custom_call.1} parent=1 // pred_region
      _
    $region9: #{tpu_custom_call.1} parent=1 // pred_fallthru
      _
    // Predicated region
    $region10: #{tpu_custom_call.1} parent=1 // pred_check
      _
    $region11: #{tpu_custom_call.1} parent=1 // pred_check_branch
      %20 = sbr.rel (0) target = $region13
    $region12: #{tpu_custom_call.1} parent=1 // pred_region
      _
    $region13: #{tpu_custom_call.1} parent=1 // pred_fallthru
      _
    // Predicated region
    $region14: #{tpu_custom_call.1} parent=1 // pred_check
      _
    $region15: #{tpu_custom_call.1} parent=1 // pred_check_branch
      %22 = sbr.rel (0) target = $region17
    $region16: #{tpu_custom_call.1} parent=1 // pred_region
      %s24 = ssub.s32 8192, 8192
      %25 = vsyncadd [#allocation4], %s24
      %s26 = sshll.u32 [#allocation3], 4
      %s27 = int_to_ptr.vmem [resolvable:$true] %s26
      %32 = dma.hbm_to_vmem [thread:$0]  %s3, 8192, %s27, [#allocation4], 256, 256, 16
    $region17: #{tpu_custom_call.1} parent=1 // pred_fallthru
      _
    // Predicated region
    $region18: #{tpu_custom_call.1} parent=1 // pred_check
      _
    $region19: #{tpu_custom_call.1} parent=1 // pred_check_branch
      %34 = sbr.rel (0) target = $region21
    $region20: #{tpu_custom_call.1} parent=1 // pred_region
      _
    $region21: #{tpu_custom_call.1} parent=1 // pred_fallthru
      _
    // Predicated region
    $region22: #{tpu_custom_call.1} parent=1 // pred_check
      _
    $region23: #{tpu_custom_call.1} parent=1 // pred_check_branch
      %36 = sbr.rel (0) target = $region25
    $region24: #{tpu_custom_call.1} parent=1 // pred_region
      _
    $region25: #{tpu_custom_call.1} parent=1 // pred_fallthru
      _
    // Predicated region
    $region26: #{tpu_custom_call.1} parent=1 // pred_check
      _
    $region27: #{tpu_custom_call.1} parent=1 // pred_check_branch
      %38 = sbr.rel (0) target = $region29
    $region28: #{tpu_custom_call.1} parent=1 // pred_region
      _
    $region29: #{tpu_custom_call.1} parent=1 // pred_fallthru
      _
    // Predicated region
    $region30: #{tpu_custom_call.1} parent=1 // pred_check
      _
    $region31: #{tpu_custom_call.1} parent=1 // pred_check_branch
      %40 = sbr.rel (0) target = $region33
    $region32: #{tpu_custom_call.1} parent=1 // pred_region
      %41 = dma.done [#allocation4], 8192
    $region33: #{tpu_custom_call.1} parent=1 // pred_fallthru
      _
    %v42 = vld [vmem:[%s0] sm:$0xff]
    %v43 = vld [vmem:[%s0 + $0x8] sm:$0xff]
    %v44 = vld [vmem:[%s0 + $0x10] sm:$0xff]
    %v45 = vld [vmem:[%s0 + $0x18] sm:$0xff]
    %v46 = vld [vmem:[%s0 + $0x20] sm:$0xff]
    %v47 = vld [vmem:[%s0 + $0x28] sm:$0xff]
    %v48 = vld [vmem:[%s0 + $0x30] sm:$0xff]
    %v49 = vld [vmem:[%s0 + $0x38] sm:$0xff]
    %v50 = vld [vmem:[%s0 + $0x40] sm:$0xff]
    %v51 = vld [vmem:[%s0 + $0x48] sm:$0xff]
    %v52 = vld [vmem:[%s0 + $0x50] sm:$0xff]
    %v53 = vld [vmem:[%s0 + $0x58] sm:$0xff]
    %v54 = vld [vmem:[%s0 + $0x60] sm:$0xff]
    %v55 = vld [vmem:[%s0 + $0x68] sm:$0xff]
    %v56 = vld [vmem:[%s0 + $0x70] sm:$0xff]
    %v57 = vld [vmem:[%s0 + $0x78] sm:$0xff]
    %v58 = vld [vmem:[%s1] sm:$0xff]
    %v59 = vld [vmem:[%s1 + $0x8] sm:$0xff]
    %v60 = vld [vmem:[%s2] sm:$0x3]
    %v62 = vlaneseq
    %v63 = vshrl.u32 %v62, 7
    %v64 = vsub.s32 0, %v63
    %v65 = vrot.slane %v60, %v64
    %v66 = vlaneseq
    %v67 = vshrl.u32 %v66, 7
    %v68 = vsub.s32 1, %v67
    %v69 = vrot.slane %v60, %v68
    %vm72 = vcmask 64512
    %v74 = vsel %vm72, %v42, 0
    %v77 = vsel %vm72, %v43, 0
    %v80 = vsel %vm72, %v44, 0
    %v83 = vsel %vm72, %v45, 0
    %v86 = vsel %vm72, %v46, 0
    %v89 = vsel %vm72, %v47, 0
    %v92 = vsel %vm72, %v48, 0
    %v95 = vsel %vm72, %v49, 0
    %v98 = vsel %vm72, %v50, 0
    %v101 = vsel %vm72, %v51, 0
    %v104 = vsel %vm72, %v52, 0
    %v107 = vsel %vm72, %v53, 0
    %v110 = vsel %vm72, %v54, 0
    %v113 = vsel %vm72, %v55, 0
    %v116 = vsel %vm72, %v56, 0
    %v119 = vsel %vm72, %v57, 0
    %121 = vmatprep.subr.mxu0 %v59
    %122 = vmatpush1.msra.mxu0 %v58
    %123 = vmatprep.subr.mxu0 0.0
    %124 = vmatpush1.msra.mxu0 0.0
    %125 = vmatprep.subr.mxu0 0.0
    %126 = vmatpush1.msra.mxu0 0.0
    %127 = vmatprep.subr.mxu0 0.0
    %128 = vmatpush1.msra.mxu0 0.0
    %129 = vmatprep.subr.mxu0 0.0
    %130 = vmatpush1.msra.mxu0 0.0
    %131 = vmatprep.subr.mxu0 0.0
    %132 = vmatpush1.msra.mxu0 0.0
    %133 = vmatprep.subr.mxu0 0.0
    %134 = vmatpush1.msra.mxu0 0.0
    %135 = vmatprep.subr.mxu0 0.0
    %136 = vmatpush1.msra.mxu0 0.0
    %137 = vmatprep.subr.mxu0 0.0
    %138 = vmatpush1.msra.mxu0 0.0
    %139 = vmatprep.subr.mxu0 0.0
    %140 = vmatpush1.msra.mxu0 0.0
    %141 = vmatprep.subr.mxu0 0.0
    %142 = vmatpush1.msra.mxu0 0.0
    %143 = vmatprep.subr.mxu0 0.0
    %144 = vmatpush1.msra.mxu0 0.0
    %145 = vmatprep.subr.mxu0 0.0
    %146 = vmatpush1.msra.mxu0 0.0
    %147 = vmatprep.subr.mxu0 0.0
    %148 = vmatpush1.msra.mxu0 0.0
    %149 = vmatprep.subr.mxu0 0.0
    %150 = vmatpush1.msra.mxu0 0.0
    %151 = vmatprep.subr.mxu0 0.0
    %152 = vmatpush1.msra.mxu0 0.0
    %153 = vmatprep.subr.mxu0 0.0
    %154 = vmatpush1.msra.mxu0 0.0
    %155 = vmatprep.subr.mxu0 0.0
    %156 = vmatpush1.msra.mxu0 0.0
    %157 = vmatprep.subr.mxu0 0.0
    %158 = vmatpush1.msra.mxu0 0.0
    %159 = vmatprep.subr.mxu0 0.0
    %160 = vmatpush1.msra.mxu0 0.0
    %161 = vmatprep.subr.mxu0 0.0
    %162 = vmatpush1.msra.mxu0 0.0
    %163 = vmatprep.subr.mxu0 0.0
    %164 = vmatpush1.msra.mxu0 0.0
    %165 = vmatprep.subr.mxu0 0.0
    %166 = vmatpush1.msra.mxu0 0.0
    %167 = vmatprep.subr.mxu0 0.0
    %168 = vmatpush1.msra.mxu0 0.0
    %169 = vmatprep.subr.mxu0 0.0
    %170 = vmatpush1.msra.mxu0 0.0
    %171 = vmatprep.subr.mxu0 0.0
    %172 = vmatpush1.msra.mxu0 0.0
    %173 = vmatprep.subr.mxu0 0.0
    %174 = vmatpush1.msra.mxu0 0.0
    %175 = vmatprep.subr.mxu0 0.0
    %176 = vmatpush1.msra.mxu0 0.0
    %177 = vmatprep.subr.mxu0 0.0
    %178 = vmatpush1.msra.mxu0 0.0
    %179 = vmatprep.subr.mxu0 0.0
    %180 = vmatpush1.msra.mxu0 0.0
    %181 = vmatprep.subr.mxu0 0.0
    %182 = vmatpush1.msra.mxu0 0.0
    %183 = vmatprep.subr.mxu0 0.0
    %184 = vmatpush1.msra.mxu0 0.0
    %185 = vmatprep.mubr.f32.mxu0 0.0
    %186 = vmatmul.mubr.f32.gmra.mrb[0].mxu0 %v74
    %v187 = vpop.f32.mrb[0].mxu0
    %v188 = vadd.f32 %v65, %v187
    %v189 = vpop.f32.mrb[0].mxu0
    %v190 = vadd.f32 %v69, %v189
    %191 = vmatprep.mubr.f32.mxu0 0.0
    %192 = vmatmul.mubr.f32.gmra.mrb[0].mxu0 %v77
    %v193 = vpop.f32.mrb[0].mxu0
    %v194 = vadd.f32 %v65, %v193
    %v195 = vpop.f32.mrb[0].mxu0
    %v196 = vadd.f32 %v69, %v195
    %197 = vmatprep.mubr.f32.mxu0 0.0
    %198 = vmatmul.mubr.f32.gmra.mrb[0].mxu0 %v80
    %v199 = vpop.f32.mrb[0].mxu0
    %v200 = vadd.f32 %v65, %v199
    %v201 = vpop.f32.mrb[0].mxu0
    %v202 = vadd.f32 %v69, %v201
    %203 = vmatprep.mubr.f32.mxu0 0.0
    %204 = vmatmul.mubr.f32.gmra.mrb[0].mxu0 %v83
    %v205 = vpop.f32.mrb[0].mxu0
    %v206 = vadd.f32 %v65, %v205
    %v207 = vpop.f32.mrb[0].mxu0
    %v208 = vadd.f32 %v69, %v207
    %209 = vmatprep.mubr.f32.mxu0 0.0
    %210 = vmatmul.mubr.f32.gmra.mrb[0].mxu0 %v86
    %v211 = vpop.f32.mrb[0].mxu0
    %v212 = vadd.f32 %v65, %v211
    %v213 = vpop.f32.mrb[0].mxu0
    %v214 = vadd.f32 %v69, %v213
    %215 = vmatprep.mubr.f32.mxu0 0.0
    %216 = vmatmul.mubr.f32.gmra.mrb[0].mxu0 %v89
    %v217 = vpop.f32.mrb[0].mxu0
    %v218 = vadd.f32 %v65, %v217
    %v219 = vpop.f32.mrb[0].mxu0
    %v220 = vadd.f32 %v69, %v219
    %221 = vmatprep.mubr.f32.mxu0 0.0
    %222 = vmatmul.mubr.f32.gmra.mrb[0].mxu0 %v92
    %v223 = vpop.f32.mrb[0].mxu0
    %v224 = vadd.f32 %v65, %v223
    %v225 = vpop.f32.mrb[0].mxu0
    %v226 = vadd.f32 %v69, %v225
    %227 = vmatprep.mubr.f32.mxu0 0.0
    %228 = vmatmul.mubr.f32.gmra.mrb[0].mxu0 %v95
    %v229 = vpop.f32.mrb[0].mxu0
    %v230 = vadd.f32 %v65, %v229
    %v231 = vpop.f32.mrb[0].mxu0
    %v232 = vadd.f32 %v69, %v231
    %233 = vmatprep.mubr.f32.mxu0 0.0
    %234 = vmatmul.mubr.f32.gmra.mrb[0].mxu0 %v98
    %v235 = vpop.f32.mrb[0].mxu0
    %v236 = vadd.f32 %v65, %v235
    %v237 = vpop.f32.mrb[0].mxu0
    %v238 = vadd.f32 %v69, %v237
    %239 = vmatprep.mubr.f32.mxu0 0.0
    %240 = vmatmul.mubr.f32.gmra.mrb[0].mxu0 %v101
    %v241 = vpop.f32.mrb[0].mxu0
    %v242 = vadd.f32 %v65, %v241
    %v243 = vpop.f32.mrb[0].mxu0
    %v244 = vadd.f32 %v69, %v243
    %245 = vmatprep.mubr.f32.mxu0 0.0
    %246 = vmatmul.mubr.f32.gmra.mrb[0].mxu0 %v104
    %v247 = vpop.f32.mrb[0].mxu0
    %v248 = vadd.f32 %v65, %v247
    %v249 = vpop.f32.mrb[0].mxu0
    %v250 = vadd.f32 %v69, %v249
    %251 = vmatprep.mubr.f32.mxu0 0.0
    %252 = vmatmul.mubr.f32.gmra.mrb[0].mxu0 %v107
    %v253 = vpop.f32.mrb[0].mxu0
    %v254 = vadd.f32 %v65, %v253
    %v255 = vpop.f32.mrb[0].mxu0
    %v256 = vadd.f32 %v69, %v255
    %257 = vmatprep.mubr.f32.mxu0 0.0
    %258 = vmatmul.mubr.f32.gmra.mrb[0].mxu0 %v110
    %v259 = vpop.f32.mrb[0].mxu0
    %v260 = vadd.f32 %v65, %v259
    %v261 = vpop.f32.mrb[0].mxu0
    %v262 = vadd.f32 %v69, %v261
    %263 = vmatprep.mubr.f32.mxu0 0.0
    %264 = vmatmul.mubr.f32.gmra.mrb[0].mxu0 %v113
    %v265 = vpop.f32.mrb[0].mxu0
    %v266 = vadd.f32 %v65, %v265
    %v267 = vpop.f32.mrb[0].mxu0
    %v268 = vadd.f32 %v69, %v267
    %269 = vmatprep.mubr.f32.mxu0 0.0
    %270 = vmatmul.mubr.f32.gmra.mrb[0].mxu0 %v116
    %v271 = vpop.f32.mrb[0].mxu0
    %v272 = vadd.f32 %v65, %v271
    %v273 = vpop.f32.mrb[0].mxu0
    %v274 = vadd.f32 %v69, %v273
    %275 = vmatprep.mubr.f32.mxu0 0.0
    %276 = vmatmul.mubr.f32.gmra.mrb[0].mxu0 %v119
    %v277 = vpop.f32.mrb[0].mxu0
    %v278 = vadd.f32 %v65, %v277
    %v279 = vpop.f32.mrb[0].mxu0
    %v280 = vadd.f32 %v69, %v279
    %281 = vdwg.mxu0
    %v282 = vmax.f32 %v188, 0.0
    %v283 = vmax.f32 %v190, 0.0
    %v284 = vmax.f32 %v194, 0.0
    %v285 = vmax.f32 %v196, 0.0
    %v286 = vmax.f32 %v200, 0.0
    %v287 = vmax.f32 %v202, 0.0
    %v288 = vmax.f32 %v206, 0.0
    %v289 = vmax.f32 %v208, 0.0
    %v290 = vmax.f32 %v212, 0.0
    %v291 = vmax.f32 %v214, 0.0
    %v292 = vmax.f32 %v218, 0.0
    %v293 = vmax.f32 %v220, 0.0
    %v294 = vmax.f32 %v224, 0.0
    %v295 = vmax.f32 %v226, 0.0
    %v296 = vmax.f32 %v230, 0.0
    %v297 = vmax.f32 %v232, 0.0
    %v298 = vmax.f32 %v236, 0.0
    %v299 = vmax.f32 %v238, 0.0
    %v300 = vmax.f32 %v242, 0.0
    %v301 = vmax.f32 %v244, 0.0
    %v302 = vmax.f32 %v248, 0.0
    %v303 = vmax.f32 %v250, 0.0
    %v304 = vmax.f32 %v254, 0.0
    %v305 = vmax.f32 %v256, 0.0
    %v306 = vmax.f32 %v260, 0.0
    %v307 = vmax.f32 %v262, 0.0
    %v308 = vmax.f32 %v266, 0.0
    %v309 = vmax.f32 %v268, 0.0
    %v310 = vmax.f32 %v272, 0.0
    %v311 = vmax.f32 %v274, 0.0
    %v312 = vmax.f32 %v278, 0.0
    %v313 = vmax.f32 %v280, 0.0
    %v314 = vld [vmem:[#allocation3] sm:$0xff]
    %v315 = vld [vmem:[#allocation3 + $0x8] sm:$0xff]
    %v316 = vld [vmem:[#allocation3 + $0x10] sm:$0xff]
    %v317 = vld [vmem:[#allocation3 + $0x18] sm:$0xff]
    %v318 = vld [vmem:[#allocation3 + $0x20] sm:$0xff]
    %v319 = vld [vmem:[#allocation3 + $0x28] sm:$0xff]
    %v320 = vld [vmem:[#allocation3 + $0x30] sm:$0xff]
    %v321 = vld [vmem:[#allocation3 + $0x38] sm:$0xff]
    %v322 = vld [vmem:[#allocation3 + $0x40] sm:$0xff]
    %v323 = vld [vmem:[#allocation3 + $0x48] sm:$0xff]
    %v324 = vld [vmem:[#allocation3 + $0x50] sm:$0xff]
    %v325 = vld [vmem:[#allocation3 + $0x58] sm:$0xff]
    %v326 = vld [vmem:[#allocation3 + $0x60] sm:$0xff]
    %v327 = vld [vmem:[#allocation3 + $0x68] sm:$0xff]
    %v328 = vld [vmem:[#allocation3 + $0x70] sm:$0xff]
    %v329 = vld [vmem:[#allocation3 + $0x78] sm:$0xff]
    %v330 = vld [vmem:[#allocation3 + $0x80] sm:$0xff]
    %v331 = vld [vmem:[#allocation3 + $0x88] sm:$0xff]
    %v332 = vld [vmem:[#allocation3 + $0x90] sm:$0xff]
    %v333 = vld [vmem:[#allocation3 + $0x98] sm:$0xff]
    %v334 = vld [vmem:[#allocation3 + $0xa0] sm:$0xff]
    %v335 = vld [vmem:[#allocation3 + $0xa8] sm:$0xff]
    %v336 = vld [vmem:[#allocation3 + $0xb0] sm:$0xff]
    %v337 = vld [vmem:[#allocation3 + $0xb8] sm:$0xff]
    %v338 = vld [vmem:[#allocation3 + $0xc0] sm:$0xff]
    %v339 = vld [vmem:[#allocation3 + $0xc8] sm:$0xff]
    %v340 = vld [vmem:[#allocation3 + $0xd0] sm:$0xff]
    %v341 = vld [vmem:[#allocation3 + $0xd8] sm:$0xff]
    %v342 = vld [vmem:[#allocation3 + $0xe0] sm:$0xff]
    %v343 = vld [vmem:[#allocation3 + $0xe8] sm:$0xff]
    %v344 = vld [vmem:[#allocation3 + $0xf0] sm:$0xff]
    %v345 = vld [vmem:[#allocation3 + $0xf8] sm:$0xff]
    %v346 = vld [vmem:[#allocation3 + $0x100] sm:$0xff]
    %v347 = vld [vmem:[#allocation3 + $0x108] sm:$0xff]
    %v348 = vld [vmem:[#allocation3 + $0x110] sm:$0xff]
    %v349 = vld [vmem:[#allocation3 + $0x118] sm:$0xff]
    %v350 = vld [vmem:[#allocation3 + $0x120] sm:$0xff]
    %v351 = vld [vmem:[#allocation3 + $0x128] sm:$0xff]
    %v352 = vld [vmem:[#allocation3 + $0x130] sm:$0xff]
    %v353 = vld [vmem:[#allocation3 + $0x138] sm:$0xff]
    %v354 = vld [vmem:[#allocation3 + $0x140] sm:$0xff]
    %v355 = vld [vmem:[#allocation3 + $0x148] sm:$0xff]
    %v356 = vld [vmem:[#allocation3 + $0x150] sm:$0xff]
    %v357 = vld [vmem:[#allocation3 + $0x158] sm:$0xff]
    %v358 = vld [vmem:[#allocation3 + $0x160] sm:$0xff]
    %v359 = vld [vmem:[#allocation3 + $0x168] sm:$0xff]
    %v360 = vld [vmem:[#allocation3 + $0x170] sm:$0xff]
    %v361 = vld [vmem:[#allocation3 + $0x178] sm:$0xff]
    %v362 = vld [vmem:[#allocation3 + $0x180] sm:$0xff]
    %v363 = vld [vmem:[#allocation3 + $0x188] sm:$0xff]
    %v364 = vld [vmem:[#allocation3 + $0x190] sm:$0xff]
    %v365 = vld [vmem:[#allocation3 + $0x198] sm:$0xff]
    %v366 = vld [vmem:[#allocation3 + $0x1a0] sm:$0xff]
    %v367 = vld [vmem:[#allocation3 + $0x1a8] sm:$0xff]
    %v368 = vld [vmem:[#allocation3 + $0x1b0] sm:$0xff]
    %v369 = vld [vmem:[#allocation3 + $0x1b8] sm:$0xff]
    %v370 = vld [vmem:[#allocation3 + $0x1c0] sm:$0xff]
    %v371 = vld [vmem:[#allocation3 + $0x1c8] sm:$0xff]
    %v372 = vld [vmem:[#allocation3 + $0x1d0] sm:$0xff]
    %v373 = vld [vmem:[#allocation3 + $0x1d8] sm:$0xff]
    %v374 = vld [vmem:[#allocation3 + $0x1e0] sm:$0xff]
    %v375 = vld [vmem:[#allocation3 + $0x1e8] sm:$0xff]
    %v376 = vld [vmem:[#allocation3 + $0x1f0] sm:$0xff]
    %v377 = vld [vmem:[#allocation3 + $0x1f8] sm:$0xff]
    %v378 = vld [vmem:[%s4] sm:$0x3]
    %v380 = vlaneseq
    %v381 = vshrl.u32 %v380, 7
    %v382 = vsub.s32 0, %v381
    %v383 = vrot.slane %v378, %v382
    %v384 = vlaneseq
    %v385 = vshrl.u32 %v384, 7
    %v386 = vsub.s32 1, %v385
    %v387 = vrot.slane %v378, %v386
    %390 = vmatprep.subr.mxu0 %v315
    %391 = vmatpush1.msra.mxu0 %v314
    %392 = vmatprep.subr.mxu0 %v317
    %393 = vmatpush1.msra.mxu0 %v316
    %394 = vmatprep.subr.mxu0 %v319
    %395 = vmatpush1.msra.mxu0 %v318
    %396 = vmatprep.subr.mxu0 %v321
    %397 = vmatpush1.msra.mxu0 %v320
    %398 = vmatprep.subr.mxu0 %v323
    %399 = vmatpush1.msra.mxu0 %v322
    %400 = vmatprep.subr.mxu0 %v325
    %401 = vmatpush1.msra.mxu0 %v324
    %402 = vmatprep.subr.mxu0 %v327
    %403 = vmatpush1.msra.mxu0 %v326
    %404 = vmatprep.subr.mxu0 %v329
    %405 = vmatpush1.msra.mxu0 %v328
    %406 = vmatprep.subr.mxu0 %v331
    %407 = vmatpush1.msra.mxu0 %v330
    %408 = vmatprep.subr.mxu0 %v333
    %409 = vmatpush1.msra.mxu0 %v332
    %410 = vmatprep.subr.mxu0 %v335
    %411 = vmatpush1.msra.mxu0 %v334
    %412 = vmatprep.subr.mxu0 %v337
    %413 = vmatpush1.msra.mxu0 %v336
    %414 = vmatprep.subr.mxu0 %v339
    %415 = vmatpush1.msra.mxu0 %v338
    %416 = vmatprep.subr.mxu0 %v341
    %417 = vmatpush1.msra.mxu0 %v340
    %418 = vmatprep.subr.mxu0 %v343
    %419 = vmatpush1.msra.mxu0 %v342
    %420 = vmatprep.subr.mxu0 %v345
    %421 = vmatpush1.msra.mxu0 %v344
    %422 = vmatprep.subr.mxu0 %v347
    %423 = vmatpush1.msra.mxu0 %v346
    %424 = vmatprep.subr.mxu0 %v349
    %425 = vmatpush1.msra.mxu0 %v348
    %426 = vmatprep.subr.mxu0 %v351
    %427 = vmatpush1.msra.mxu0 %v350
    %428 = vmatprep.subr.mxu0 %v353
    %429 = vmatpush1.msra.mxu0 %v352
    %430 = vmatprep.subr.mxu0 %v355
    %431 = vmatpush1.msra.mxu0 %v354
    %432 = vmatprep.subr.mxu0 %v357
    %433 = vmatpush1.msra.mxu0 %v356
    %434 = vmatprep.subr.mxu0 %v359
    %435 = vmatpush1.msra.mxu0 %v358
    %436 = vmatprep.subr.mxu0 %v361
    %437 = vmatpush1.msra.mxu0 %v360
    %438 = vmatprep.subr.mxu0 %v363
    %439 = vmatpush1.msra.mxu0 %v362
    %440 = vmatprep.subr.mxu0 %v365
    %441 = vmatpush1.msra.mxu0 %v364
    %442 = vmatprep.subr.mxu0 %v367
    %443 = vmatpush1.msra.mxu0 %v366
    %444 = vmatprep.subr.mxu0 %v369
    %445 = vmatpush1.msra.mxu0 %v368
    %446 = vmatprep.subr.mxu0 %v371
    %447 = vmatpush1.msra.mxu0 %v370
    %448 = vmatprep.subr.mxu0 %v373
    %449 = vmatpush1.msra.mxu0 %v372
    %450 = vmatprep.subr.mxu0 %v375
    %451 = vmatpush1.msra.mxu0 %v374
    %452 = vmatprep.subr.mxu0 %v377
    %453 = vmatpush1.msra.mxu0 %v376
    %454 = vmatprep.mubr.f32.mxu0 %v283
    %455 = vmatmul.mubr.f32.gmra.mrb[0].mxu0 %v282
    %v456 = vpop.f32.mrb[0].mxu0
    %v457 = vadd.f32 %v383, %v456
    %v458 = vpop.f32.mrb[0].mxu0
    %v459 = vadd.f32 %v387, %v458
    %460 = vmatprep.mubr.f32.mxu0 %v285
    %461 = vmatmul.mubr.f32.gmra.mrb[0].mxu0 %v284
    %v462 = vpop.f32.mrb[0].mxu0
    %v463 = vadd.f32 %v383, %v462
    %v464 = vpop.f32.mrb[0].mxu0
    %v465 = vadd.f32 %v387, %v464
    %466 = vmatprep.mubr.f32.mxu0 %v287
    %467 = vmatmul.mubr.f32.gmra.mrb[0].mxu0 %v286
    %v468 = vpop.f32.mrb[0].mxu0
    %v469 = vadd.f32 %v383, %v468
    %v470 = vpop.f32.mrb[0].mxu0
    %v471 = vadd.f32 %v387, %v470
    %472 = vmatprep.mubr.f32.mxu0 %v289
    %473 = vmatmul.mubr.f32.gmra.mrb[0].mxu0 %v288
    %v474 = vpop.f32.mrb[0].mxu0
    %v475 = vadd.f32 %v383, %v474
    %v476 = vpop.f32.mrb[0].mxu0
    %v477 = vadd.f32 %v387, %v476
    %478 = vmatprep.mubr.f32.mxu0 %v291
    %479 = vmatmul.mubr.f32.gmra.mrb[0].mxu0 %v290
    %v480 = vpop.f32.mrb[0].mxu0
    %v481 = vadd.f32 %v383, %v480
    %v482 = vpop.f32.mrb[0].mxu0
    %v483 = vadd.f32 %v387, %v482
    %484 = vmatprep.mubr.f32.mxu0 %v293
    %485 = vmatmul.mubr.f32.gmra.mrb[0].mxu0 %v292
    %v486 = vpop.f32.mrb[0].mxu0
    %v487 = vadd.f32 %v383, %v486
    %v488 = vpop.f32.mrb[0].mxu0
    %v489 = vadd.f32 %v387, %v488
    %490 = vmatprep.mubr.f32.mxu0 %v295
    %491 = vmatmul.mubr.f32.gmra.mrb[0].mxu0 %v294
    %v492 = vpop.f32.mrb[0].mxu0
    %v493 = vadd.f32 %v383, %v492
    %v494 = vpop.f32.mrb[0].mxu0
    %v495 = vadd.f32 %v387, %v494
    %496 = vmatprep.mubr.f32.mxu0 %v297
    %497 = vmatmul.mubr.f32.gmra.mrb[0].mxu0 %v296
    %v498 = vpop.f32.mrb[0].mxu0
    %v499 = vadd.f32 %v383, %v498
    %v500 = vpop.f32.mrb[0].mxu0
    %v501 = vadd.f32 %v387, %v500
    %502 = vmatprep.mubr.f32.mxu0 %v299
    %503 = vmatmul.mubr.f32.gmra.mrb[0].mxu0 %v298
    %v504 = vpop.f32.mrb[0].mxu0
    %v505 = vadd.f32 %v383, %v504
    %v506 = vpop.f32.mrb[0].mxu0
    %v507 = vadd.f32 %v387, %v506
    %508 = vmatprep.mubr.f32.mxu0 %v301
    %509 = vmatmul.mubr.f32.gmra.mrb[0].mxu0 %v300
    %v510 = vpop.f32.mrb[0].mxu0
    %v511 = vadd.f32 %v383, %v510
    %v512 = vpop.f32.mrb[0].mxu0
    %v513 = vadd.f32 %v387, %v512
    %514 = vmatprep.mubr.f32.mxu0 %v303
    %515 = vmatmul.mubr.f32.gmra.mrb[0].mxu0 %v302
    %v516 = vpop.f32.mrb[0].mxu0
    %v517 = vadd.f32 %v383, %v516
    %v518 = vpop.f32.mrb[0].mxu0
    %v519 = vadd.f32 %v387, %v518
    %520 = vmatprep.mubr.f32.mxu0 %v305
    %521 = vmatmul.mubr.f32.gmra.mrb[0].mxu0 %v304
    %v522 = vpop.f32.mrb[0].mxu0
    %v523 = vadd.f32 %v383, %v522
    %v524 = vpop.f32.mrb[0].mxu0
    %v525 = vadd.f32 %v387, %v524
    %526 = vmatprep.mubr.f32.mxu0 %v307
    %527 = vmatmul.mubr.f32.gmra.mrb[0].mxu0 %v306
    %v528 = vpop.f32.mrb[0].mxu0
    %v529 = vadd.f32 %v383, %v528
    %v530 = vpop.f32.mrb[0].mxu0
    %v531 = vadd.f32 %v387, %v530
    %532 = vmatprep.mubr.f32.mxu0 %v309
    %533 = vmatmul.mubr.f32.gmra.mrb[0].mxu0 %v308
    %v534 = vpop.f32.mrb[0].mxu0
    %v535 = vadd.f32 %v383, %v534
    %v536 = vpop.f32.mrb[0].mxu0
    %v537 = vadd.f32 %v387, %v536
    %538 = vmatprep.mubr.f32.mxu0 %v311
    %539 = vmatmul.mubr.f32.gmra.mrb[0].mxu0 %v310
    %v540 = vpop.f32.mrb[0].mxu0
    %v541 = vadd.f32 %v383, %v540
    %v542 = vpop.f32.mrb[0].mxu0
    %v543 = vadd.f32 %v387, %v542
    %544 = vmatprep.mubr.f32.mxu0 %v313
    %545 = vmatmul.mubr.f32.gmra.mrb[0].mxu0 %v312
    %v546 = vpop.f32.mrb[0].mxu0
    %v547 = vadd.f32 %v383, %v546
    %v548 = vpop.f32.mrb[0].mxu0
    %v549 = vadd.f32 %v387, %v548
    %550 = vdwg.mxu0
    %v551 = vmax.f32 %v457, 0.0
    %v552 = vmax.f32 %v459, 0.0
    %v553 = vmax.f32 %v463, 0.0
    %v554 = vmax.f32 %v465, 0.0
    %v555 = vmax.f32 %v469, 0.0
    %v556 = vmax.f32 %v471, 0.0
    %v557 = vmax.f32 %v475, 0.0
    %v558 = vmax.f32 %v477, 0.0
    %v559 = vmax.f32 %v481, 0.0
    %v560 = vmax.f32 %v483, 0.0
    %v561 = vmax.f32 %v487, 0.0
    %v562 = vmax.f32 %v489, 0.0
    %v563 = vmax.f32 %v493, 0.0
    %v564 = vmax.f32 %v495, 0.0
    %v565 = vmax.f32 %v499, 0.0
    %v566 = vmax.f32 %v501, 0.0
    %v567 = vmax.f32 %v505, 0.0
    %v568 = vmax.f32 %v507, 0.0
    %v569 = vmax.f32 %v511, 0.0
    %v570 = vmax.f32 %v513, 0.0
    %v571 = vmax.f32 %v517, 0.0
    %v572 = vmax.f32 %v519, 0.0
    %v573 = vmax.f32 %v523, 0.0
    %v574 = vmax.f32 %v525, 0.0
    %v575 = vmax.f32 %v529, 0.0
    %v576 = vmax.f32 %v531, 0.0
    %v577 = vmax.f32 %v535, 0.0
    %v578 = vmax.f32 %v537, 0.0
    %v579 = vmax.f32 %v541, 0.0
    %v580 = vmax.f32 %v543, 0.0
    %v581 = vmax.f32 %v547, 0.0
    %v582 = vmax.f32 %v549, 0.0
    %v583 = vld [vmem:[%s5] sm:$0x3]
    %v585 = vlaneseq
    %v586 = vshrl.u32 %v585, 7
    %v587 = vsub.s32 0, %v586
    %v588 = vrot.slane %v583, %v587
    %v589 = vlaneseq
    %v590 = vshrl.u32 %v589, 7
    %v591 = vsub.s32 1, %v590
    %v592 = vrot.slane %v583, %v591
    %v595 = vmul.f32 %v551, %v588
    %v596 = vmul.f32 %v552, %v592
    %v597 = vmul.f32 %v553, %v588
    %v598 = vmul.f32 %v554, %v592
    %v599 = vmul.f32 %v555, %v588
    %v600 = vmul.f32 %v556, %v592
    %v601 = vmul.f32 %v557, %v588
    %v602 = vmul.f32 %v558, %v592
    %v603 = vmul.f32 %v559, %v588
    %v604 = vmul.f32 %v560, %v592
    %v605 = vmul.f32 %v561, %v588
    %v606 = vmul.f32 %v562, %v592
    %v607 = vmul.f32 %v563, %v588
    %v608 = vmul.f32 %v564, %v592
    %v609 = vmul.f32 %v565, %v588
    %v610 = vmul.f32 %v566, %v592
    %v611 = vmul.f32 %v567, %v588
    %v612 = vmul.f32 %v568, %v592
    %v613 = vmul.f32 %v569, %v588
    %v614 = vmul.f32 %v570, %v592
    %v615 = vmul.f32 %v571, %v588
    %v616 = vmul.f32 %v572, %v592
    %v617 = vmul.f32 %v573, %v588
    %v618 = vmul.f32 %v574, %v592
    %v619 = vmul.f32 %v575, %v588
    %v620 = vmul.f32 %v576, %v592
    %v621 = vmul.f32 %v577, %v588
    %v622 = vmul.f32 %v578, %v592
    %v623 = vmul.f32 %v579, %v588
    %v624 = vmul.f32 %v580, %v592
    %v625 = vmul.f32 %v581, %v588
    %v626 = vmul.f32 %v582, %v592
    %v627 = vadd.f32 %v595, %v596
    %628 = vadd.xlane.f32.xlu0 %v627
    %v629 = vpop.xlane.xlu0 %628
    %v630 = vadd.f32 %v597, %v598
    %631 = vadd.xlane.f32.xlu0 %v630
    %v632 = vpop.xlane.xlu0 %631
    %v633 = vadd.f32 %v599, %v600
    %634 = vadd.xlane.f32.xlu0 %v633
    %v635 = vpop.xlane.xlu0 %634
    %v636 = vadd.f32 %v601, %v602
    %637 = vadd.xlane.f32.xlu0 %v636
    %v638 = vpop.xlane.xlu0 %637
    %v639 = vadd.f32 %v603, %v604
    %640 = vadd.xlane.f32.xlu0 %v639
    %v641 = vpop.xlane.xlu0 %640
    %v642 = vadd.f32 %v605, %v606
    %643 = vadd.xlane.f32.xlu0 %v642
    %v644 = vpop.xlane.xlu0 %643
    %v645 = vadd.f32 %v607, %v608
    %646 = vadd.xlane.f32.xlu0 %v645
    %v647 = vpop.xlane.xlu0 %646
    %v648 = vadd.f32 %v609, %v610
    %649 = vadd.xlane.f32.xlu0 %v648
    %v650 = vpop.xlane.xlu0 %649
    %v651 = vadd.f32 %v611, %v612
    %652 = vadd.xlane.f32.xlu0 %v651
    %v653 = vpop.xlane.xlu0 %652
    %v654 = vadd.f32 %v613, %v614
    %655 = vadd.xlane.f32.xlu0 %v654
    %v656 = vpop.xlane.xlu0 %655
    %v657 = vadd.f32 %v615, %v616
    %658 = vadd.xlane.f32.xlu0 %v657
    %v659 = vpop.xlane.xlu0 %658
    %v660 = vadd.f32 %v617, %v618
    %661 = vadd.xlane.f32.xlu0 %v660
    %v662 = vpop.xlane.xlu0 %661
    %v663 = vadd.f32 %v619, %v620
    %664 = vadd.xlane.f32.xlu0 %v663
    %v665 = vpop.xlane.xlu0 %664
    %v666 = vadd.f32 %v621, %v622
    %667 = vadd.xlane.f32.xlu0 %v666
    %v668 = vpop.xlane.xlu0 %667
    %v669 = vadd.f32 %v623, %v624
    %670 = vadd.xlane.f32.xlu0 %v669
    %v671 = vpop.xlane.xlu0 %670
    %v672 = vadd.f32 %v625, %v626
    %673 = vadd.xlane.f32.xlu0 %v672
    %v674 = vpop.xlane.xlu0 %673
    %s675 = sld [smem:[#allocation2]]
    %v676 = vstv %s675
    %v677 = vadd.f32 %v629, %v676
    %v678 = vadd.f32 %v632, %v676
    %v679 = vadd.f32 %v635, %v676
    %v680 = vadd.f32 %v638, %v676
    %v681 = vadd.f32 %v641, %v676
    %v682 = vadd.f32 %v644, %v676
    %v683 = vadd.f32 %v647, %v676
    %v684 = vadd.f32 %v650, %v676
    %v685 = vadd.f32 %v653, %v676
    %v686 = vadd.f32 %v656, %v676
    %v687 = vadd.f32 %v659, %v676
    %v688 = vadd.f32 %v662, %v676
    %v689 = vadd.f32 %v665, %v676
    %v690 = vadd.f32 %v668, %v676
    %v691 = vadd.f32 %v671, %v676
    %v692 = vadd.f32 %v674, %v676
    %v709 = vlaneseq
    %v710 = vand.u32 %v709, 127
    %v711 = vlaneseq
    %v712 = vshrl.u32 %v711, 7
    %v713 = vsub.s32 %v710, %v712
    %v714 = vrot.slane %v677, %v713
    %v715 = vadd.s32 %v710, 4294967288
    %v716 = vlaneseq
    %v717 = vshrl.u32 %v716, 7
    %v718 = vsub.s32 %v715, %v717
    %v719 = vrot.slane %v678, %v718
    %vm720 = vcmask 130112
    %v721 = vsel %vm720, %v719, %v714
    %v722 = vadd.s32 %v710, 4294967280
    %v723 = vlaneseq
    %v724 = vshrl.u32 %v723, 7
    %v725 = vsub.s32 %v722, %v724
    %v726 = vrot.slane %v679, %v725
    %vm727 = vcmask 195712
    %v728 = vsel %vm727, %v726, %v721
    %v729 = vadd.s32 %v710, 4294967272
    %v730 = vlaneseq
    %v731 = vshrl.u32 %v730, 7
    %v732 = vsub.s32 %v729, %v731
    %v733 = vrot.slane %v680, %v732
    %vm734 = vcmask 261312
    %v735 = vsel %vm734, %v733, %v728
    %v736 = vadd.s32 %v710, 4294967264
    %v737 = vlaneseq
    %v738 = vshrl.u32 %v737, 7
    %v739 = vsub.s32 %v736, %v738
    %v740 = vrot.slane %v681, %v739
    %vm741 = vcmask 326912
    %v742 = vsel %vm741, %v740, %v735
    %v743 = vadd.s32 %v710, 4294967256
    %v744 = vlaneseq
    %v745 = vshrl.u32 %v744, 7
    %v746 = vsub.s32 %v743, %v745
    %v747 = vrot.slane %v682, %v746
    %vm748 = vcmask 392512
    %v749 = vsel %vm748, %v747, %v742
    %v750 = vadd.s32 %v710, 4294967248
    %v751 = vlaneseq
    %v752 = vshrl.u32 %v751, 7
    %v753 = vsub.s32 %v750, %v752
    %v754 = vrot.slane %v683, %v753
    %vm755 = vcmask 458112
    %v756 = vsel %vm755, %v754, %v749
    %v757 = vadd.s32 %v710, 4294967240
    %v758 = vlaneseq
    %v759 = vshrl.u32 %v758, 7
    %v760 = vsub.s32 %v757, %v759
    %v761 = vrot.slane %v684, %v760
    %vm762 = vcmask 523712
    %v763 = vsel %vm762, %v761, %v756
    %v764 = vadd.s32 %v710, 4294967232
    %v765 = vlaneseq
    %v766 = vshrl.u32 %v765, 7
    %v767 = vsub.s32 %v764, %v766
    %v768 = vrot.slane %v685, %v767
    %vm769 = vcmask 589312
    %v770 = vsel %vm769, %v768, %v763
    %v771 = vadd.s32 %v710, 4294967224
    %v772 = vlaneseq
    %v773 = vshrl.u32 %v772, 7
    %v774 = vsub.s32 %v771, %v773
    %v775 = vrot.slane %v686, %v774
    %vm776 = vcmask 654912
    %v777 = vsel %vm776, %v775, %v770
    %v778 = vadd.s32 %v710, 4294967216
    %v779 = vlaneseq
    %v780 = vshrl.u32 %v779, 7
    %v781 = vsub.s32 %v778, %v780
    %v782 = vrot.slane %v687, %v781
    %vm783 = vcmask 720512
    %v784 = vsel %vm783, %v782, %v777
    %v785 = vadd.s32 %v710, 4294967208
    %v786 = vlaneseq
    %v787 = vshrl.u32 %v786, 7
    %v788 = vsub.s32 %v785, %v787
    %v789 = vrot.slane %v688, %v788
    %vm790 = vcmask 786112
    %v791 = vsel %vm790, %v789, %v784
    %v792 = vadd.s32 %v710, 4294967200
    %v793 = vlaneseq
    %v794 = vshrl.u32 %v793, 7
    %v795 = vsub.s32 %v792, %v794
    %v796 = vrot.slane %v689, %v795
    %vm797 = vcmask 851712
    %v798 = vsel %vm797, %v796, %v791
    %v799 = vadd.s32 %v710, 4294967192
    %v800 = vlaneseq
    %v801 = vshrl.u32 %v800, 7
    %v802 = vsub.s32 %v799, %v801
    %v803 = vrot.slane %v690, %v802
    %vm804 = vcmask 917312
    %v805 = vsel %vm804, %v803, %v798
    %v806 = vadd.s32 %v710, 4294967184
    %v807 = vlaneseq
    %v808 = vshrl.u32 %v807, 7
    %v809 = vsub.s32 %v806, %v808
    %v810 = vrot.slane %v691, %v809
    %vm811 = vcmask 982912
    %v812 = vsel %vm811, %v810, %v805
    %v813 = vadd.s32 %v710, 4294967176
    %v814 = vlaneseq
    %v815 = vshrl.u32 %v814, 7
    %v816 = vsub.s32 %v813, %v815
    %v817 = vrot.slane %v692, %v816
    %vm818 = vcmask 1048512
    %v819 = vsel %vm818, %v817, %v812
    %821 = vst [vmem:[#allocation6] sm:$0x1] %v819
    // Predicated region
    $region34: #{tpu_custom_call.1} parent=1 // pred_check
      _
    $region35: #{tpu_custom_call.1} parent=1 // pred_check_branch
      %823 = sbr.rel (0) target = $region37
    $region36: #{tpu_custom_call.1} parent=1 // pred_region
      %s825 = ssub.s32 16, 16
      %826 = vsyncadd [#allocation5], %s825
      %s828 = sshll.u32 [#allocation6], 4
      %s829 = int_to_ptr.vmem [resolvable:$true] %s828
      %831 = dma.vmem_to_hbm [thread:$0]  %s829, 16, %s7, [#allocation5]
    $region37: #{tpu_custom_call.1} parent=1 // pred_fallthru
      _
    // Predicated region
    $region38: #{tpu_custom_call.1} parent=1 // pred_check
      _
    $region39: #{tpu_custom_call.1} parent=1 // pred_check_branch
      %833 = sbr.rel (0) target = $region41
    $region40: #{tpu_custom_call.1} parent=1 // pred_region
      %834 = dma.done [#allocation5], 16
    $region41: #{tpu_custom_call.1} parent=1 // pred_fallthru
      _
    %835 = vsyncpa [#allocation4], 1
    %836 = vsyncpa [#allocation5], 1

</llo_original>
